<compile_context>
chip_gen: v5e
topology: v5e:2x2
jax: 0.10.0
libtpu: 0.0.40
codegen_flags: <defaults>
</compile_context>

<pallas_src>
import jax
import jax.numpy as jnp
from jax import lax
from jax.experimental import pallas as pl
from jax.experimental.pallas import tpu as pltpu


def mlp_kernel(x_ref, w1_ref, b1_ref, w2_ref, b2_ref, o_ref):
    # Hidden layer on the MXU: (TB, D_in) @ (D_in, H) -> (TB, H), f32 acc.
    h = jnp.dot(x_ref[...], w1_ref[...], preferred_element_type=jnp.float32)
    # Bias + ReLU on the VPU, in f32.
    h = jnp.maximum(h + b1_ref[...], 0.0)
    # Output layer on the MXU in "A @ B.T" form: (1, H) x (TB, H)^T -> (1, TB).
    # The result is lane-dense, so the store below is an unmasked full-lane vst.
    y = lax.dot_general(
        w2_ref[...], h, (((1,), (1,)), ((), ())),
        preferred_element_type=jnp.float32,
    )
    y = y + b2_ref[0]                       # scalar output bias from 1-D SMEM
    o_ref[...] = y.astype(o_ref.dtype)


def _choose_tile(B, block_batch):
    """Batch tile: >= ~4 grid steps when possible (pipelining + v7x megacore),
    rows a multiple of 128 (lane-dense output), capped by block_batch."""
    if B <= 128:
        return B                            # single tiny tile; block = full dim
    cap = max(128, (block_batch // 128) * 128)
    target = -(-B // 4)                     # ceil(B / 4)
    tb = max(128, ((target + 127) // 128) * 128)
    return min(tb, cap)


def linear_lag_forward(x, w1, b1, w2_row, b2, *, block_batch=8192,
                       compute_dtype=None):
    """Forward pass of LinearLagModel.

    x:      (B, D_in)  float32
    w1:     (D_in, H)  hidden weight, (in, out) = transpose of PyTorch layout
    b1:     (1, H)     hidden bias row
    w2_row: (1, H)     output weight row (= PyTorch linear_out.weight)
    b2:     (1,)       output bias (scalar, lives in SMEM)
    compute_dtype: e.g. jnp.bfloat16 to halve the HBM x stream on v6e/v7x
                   (MXU still accumulates in f32; output keeps x's dtype).
    returns (B, 1) with x.dtype.
    """
    B, D_in = x.shape
    H = w1.shape[1]
    assert w1.shape == (D_in, H)
    assert b1.shape == (1, H)
    assert w2_row.shape == (1, H)
    assert b2.shape == (1,)

    out_dtype = x.dtype
    if compute_dtype is not None:
        x = x.astype(compute_dtype)
        w1 = w1.astype(compute_dtype)

    tb = _choose_tile(B, block_batch)
    num_tiles = int(pl.cdiv(B, tb))

    out = pl.pallas_call(
        mlp_kernel,
        out_shape=jax.ShapeDtypeStruct((num_tiles, tb), out_dtype),
        grid_spec=pltpu.PrefetchScalarGridSpec(
            num_scalar_prefetch=0,
            grid=(num_tiles,),
            in_specs=[
                # x streams through VMEM one batch tile per grid step.
                pl.BlockSpec((tb, D_in), lambda i: (i, 0)),
                # Weights / bias rows: constant block index -> stay resident.
                pl.BlockSpec((D_in, H), lambda i: (0, 0)),
                pl.BlockSpec((1, H), lambda i: (0, 0)),
                pl.BlockSpec((1, H), lambda i: (0, 0)),
                # Scalar output bias in SMEM (1-D: no [8,128] word padding).
                pl.BlockSpec(memory_space=pltpu.MemorySpace.SMEM),
            ],
            out_specs=pl.BlockSpec((1, tb), lambda i: (i, 0)),
        ),
        compiler_params=pltpu.CompilerParams(
            # Batch tiles are independent -> megacore sharding on v7x.
            dimension_semantics=("parallel",),
            vmem_limit_bytes=32 * 1024 * 1024,
        ),
    )(x, w1, b1, w2_row, b2)

    # (num_tiles, tb) lane-dense rows -> (B, 1); drops pad rows when B % tb != 0.
    return out.reshape(-1)[:B].reshape(B, 1)


def init_params(key, input_dim, hidden_dim):
    """Deterministic init mirroring nn.Linear's uniform(-1/sqrt(fan_in), ...)."""
    k1, k2, k3, k4 = jax.random.split(key, 4)
    bound1 = 1.0 / jnp.sqrt(jnp.float32(input_dim))
    bound2 = 1.0 / jnp.sqrt(jnp.float32(hidden_dim))
    # w1 stored as (in, out) == transpose of PyTorch's linear_hidden.weight.
    w1 = jax.random.uniform(k1, (input_dim, hidden_dim), jnp.float32, -bound1, bound1)
    b1 = jax.random.uniform(k2, (1, hidden_dim), jnp.float32, -bound1, bound1)
    # w2 stored as a lane-dense (1, hidden_dim) row (== PyTorch linear_out.weight).
    w2_row = jax.random.uniform(k3, (1, hidden_dim), jnp.float32, -bound2, bound2)
    b2 = jax.random.uniform(k4, (1,), jnp.float32, -bound2, bound2)
    return w1, b1, w2_row, b2


if __name__ == "__main__":
    input_dim = 16    # flattened lagged feature dimension
    hidden_dim = 32

    key = jax.random.PRNGKey(0)
    kx, kp, kx2 = jax.random.split(key, 3)
    w1, b1, w2_row, b2 = init_params(kp, input_dim, hidden_dim)

    def reference(xx):
        # Same math as the PyTorch forward: relu(x @ W1.T + b1) @ W2.T + b2.
        h = jnp.maximum(xx @ w1 + b1, 0.0)
        return h @ w2_row.T + b2

    # Small shape consistent with the module (single tiny tile, full-dim block).
    x_small = jax.random.normal(kx, (8, input_dim), jnp.float32)
    out_small = jax.block_until_ready(linear_lag_forward(x_small, w1, b1, w2_row, b2))
    assert out_small.shape == (8, 1)
    assert jnp.allclose(out_small, reference(x_small), atol=1e-3, rtol=1e-3)

    # Ragged batch (B % tb != 0) exercising the tiled, weights-resident,
    # multi-step grid path with masked edge input blocks.
    x_big = jax.random.normal(kx2, (2050, input_dim), jnp.float32)
    out_big = jax.block_until_ready(
        linear_lag_forward(x_big, w1, b1, w2_row, b2, block_batch=512))
    assert out_big.shape == (2050, 1)
    assert jnp.allclose(out_big, reference(x_big), atol=1e-3, rtol=1e-3)

    # Default (large) tile path: ~4 grid steps, ragged tail.
    out_big2 = jax.block_until_ready(linear_lag_forward(x_big, w1, b1, w2_row, b2))
    assert out_big2.shape == (2050, 1)
    assert jnp.allclose(out_big2, reference(x_big), atol=1e-3, rtol=1e-3)

    print("KERNEL_OK")
</pallas_src>

<mosaic_0001>
module attributes {stable_mosaic.version = 11 : i64} {
  func.func @mlp_kernel(%arg0: i32, %arg1: memref<8x16xf32, #tpu.memory_space<vmem>>, %arg2: memref<16x32xf32, #tpu.memory_space<vmem>>, %arg3: memref<1x32xf32, #tpu.memory_space<vmem>>, %arg4: memref<1x32xf32, #tpu.memory_space<vmem>>, %arg5: memref<1xf32, #tpu.memory_space<smem>>, %arg6: memref<1x8xf32, #tpu.memory_space<vmem>>) attributes {dimension_semantics = [#tpu.dimension_semantics<parallel>], iteration_bounds = array<i64: 1>, scalar_prefetch = 0 : i64, scratch_operands = 0 : i64, tpu.core_type = #tpu.core_type<tc>, window_params = [{transform_indices = @transform_0, window_bounds = array<i64: 8, 16>}, {pipeline_mode = #tpu.pipeline_mode<synchronous>, transform_indices = @transform_1, window_bounds = array<i64: 16, 32>}, {pipeline_mode = #tpu.pipeline_mode<synchronous>, transform_indices = @transform_2, window_bounds = array<i64: 1, 32>}, {pipeline_mode = #tpu.pipeline_mode<synchronous>, transform_indices = @transform_3, window_bounds = array<i64: 1, 32>}, {transform_indices = @transform_4, window_bounds = array<i64: 1>}, {transform_indices = @transform_5, window_bounds = array<i64: 1, 8>}]} {
    %c0 = arith.constant 0 : index
    %c0_0 = arith.constant 0 : index
    %0 = vector.load %arg1[%c0, %c0_0] : memref<8x16xf32, #tpu.memory_space<vmem>>, vector<8x16xf32>
    %c0_1 = arith.constant 0 : index
    %c0_2 = arith.constant 0 : index
    %1 = vector.load %arg2[%c0_1, %c0_2] : memref<16x32xf32, #tpu.memory_space<vmem>>, vector<16x32xf32>
    %cst = arith.constant dense<0.000000e+00> : vector<8x32xf32>
    %2 = tpu.matmul %0, %1, %cst {dimension_numbers = #tpu.dot_dimension_numbers<[1], [0], [0], [1], [0, 0, 1, 1], [], []>} : vector<8x16xf32>, vector<16x32xf32>, vector<8x32xf32> -> vector<8x32xf32>
    %c0_3 = arith.constant 0 : index
    %c0_4 = arith.constant 0 : index
    %3 = vector.load %arg3[%c0_3, %c0_4] : memref<1x32xf32, #tpu.memory_space<vmem>>, vector<1x32xf32>
    %4 = vector.broadcast %3 : vector<1x32xf32> to vector<8x32xf32>
    %5 = arith.addf %2, %4 : vector<8x32xf32>
    %cst_5 = arith.constant 0.000000e+00 : f32
    %6 = vector.broadcast %cst_5 : f32 to vector<8x32xf32>
    %7 = arith.maximumf %5, %6 : vector<8x32xf32>
    %c0_6 = arith.constant 0 : index
    %c0_7 = arith.constant 0 : index
    %8 = vector.load %arg4[%c0_6, %c0_7] : memref<1x32xf32, #tpu.memory_space<vmem>>, vector<1x32xf32>
    %cst_8 = arith.constant dense<0.000000e+00> : vector<1x8xf32>
    %9 = tpu.matmul %8, %7, %cst_8 {dimension_numbers = #tpu.dot_dimension_numbers<[1], [1], [0], [0], [0, 0, 1, 0], [], []>} : vector<1x32xf32>, vector<8x32xf32>, vector<1x8xf32> -> vector<1x8xf32>
    %c0_9 = arith.constant 0 : index
    %10 = memref.load %arg5[%c0_9] : memref<1xf32, #tpu.memory_space<smem>>
    %11 = vector.broadcast %10 : f32 to vector<1x8xf32>
    %12 = arith.addf %9, %11 : vector<1x8xf32>
    %c0_10 = arith.constant 0 : index
    %c0_11 = arith.constant 0 : index
    %13 = vector.load %arg6[%c0_10, %c0_11] : memref<1x8xf32, #tpu.memory_space<vmem>>, vector<1x8xf32>
    tpu.vector_store %arg6[%c0_10, %c0_11], %12 {strides = array<i32>} : memref<1x8xf32, #tpu.memory_space<vmem>>, vector<1x8xf32>,
    return
  }
  func.func @transform_0(%arg0: i32) -> (i32, i32) {
    %c0_i32 = arith.constant 0 : i32
    %c0_i32_0 = arith.constant 0 : i32
    return %arg0, %c0_i32 : i32, i32
  }
  func.func @transform_1(%arg0: i32) -> (i32, i32) {
    %c0_i32 = arith.constant 0 : i32
    %c0_i32_0 = arith.constant 0 : i32
    %c0_i32_1 = arith.constant 0 : i32
    return %c0_i32, %c0_i32_0 : i32, i32
  }
  func.func @transform_2(%arg0: i32) -> (i32, i32) {
    %c0_i32 = arith.constant 0 : i32
    %c0_i32_0 = arith.constant 0 : i32
    %c0_i32_1 = arith.constant 0 : i32
    return %c0_i32, %c0_i32_0 : i32, i32
  }
  func.func @transform_3(%arg0: i32) -> (i32, i32) {
    %c0_i32 = arith.constant 0 : i32
    %c0_i32_0 = arith.constant 0 : i32
    %c0_i32_1 = arith.constant 0 : i32
    return %c0_i32, %c0_i32_0 : i32, i32
  }
  func.func @transform_4(%arg0: i32) -> i32 {
    %c0_i32 = arith.constant 0 : i32
    %c0_i32_0 = arith.constant 0 : i32
    return %c0_i32 : i32
  }
  func.func @transform_5(%arg0: i32) -> (i32, i32) {
    %c0_i32 = arith.constant 0 : i32
    %c0_i32_0 = arith.constant 0 : i32
    return %arg0, %c0_i32 : i32, i32
  }
}

</mosaic_0001>

<llo_original>
// kernel: tpu_custom_call.1
$region0: #{tpu_custom_call.1}
  #allocation0 [shape = 'u32[]', space=smem, size = 0x4, offset = 0x4, fixed_abs, tag = 'smem constant byte address 0x4 - core index']
  #allocation1 [shape = 'u32[72,128]{1,0:T(1,128)}', space=vmem, size = 0x9000, scoped, tag = 'internal scratch']
  #allocation2 [shape = 'f32[1]{0:T(128)S(6)}', space=smem, size = 0x200, scoped, tag = 'scoped memory for tpu_custom_call.1']
  %s0 = inlined_call_operand.hbm [shape: f32[8,16], index: 0, kind: input, shape index: {}]
  %s1 = inlined_call_operand.hbm [shape: f32[16,32], index: 1, kind: input, shape index: {}]
  %s2 = inlined_call_operand.vmem [shape: f32[1,32], index: 2, kind: input, shape index: {}]
  %s3 = inlined_call_operand.vmem [shape: f32[1,32], index: 3, kind: input, shape index: {}]
  %s4 = inlined_call_operand.<no memory space> [shape: f32[1], index: 4, kind: input, shape index: {}]
  %s5 = inlined_call_operand.hbm [shape: f32[1,8], index: 5, kind: output, shape index: {}]
  %s6 = sld [smem:[#allocation0]]
  $region38: #{tpu_custom_call.1} parent=0
    _
  %s8 = ssub.s32 1, %s6
  %s9 = scalar_select 0, %s8, %s6
  %10 = sst [smem:[#allocation2]] %s4
  $region1: #{tpu_custom_call.1} parent=0
    #allocation3 [shape = 'u8[4096]{0}', space=vmem, size = 0x1000, scoped, tag = 'input window, operand 0, single buffered']
    #allocation4 [shape = 's32[1]{0}', space=sflag, size = 0x4, scoped, tag = 'scoped memory for tpu_custom_call.1']
    #allocation5 [shape = 's32[1]{0}', space=sflag, size = 0x4, scoped, tag = 'scoped memory for tpu_custom_call.1']
    #allocation6 [shape = 'u8[8192]{0}', space=vmem, size = 0x2000, scoped, tag = 'input window, operand 1, single buffered']
    #allocation7 [shape = 's32[1]{0}', space=sflag, size = 0x4, scoped, tag = 'scoped memory for tpu_custom_call.1']
    #allocation8 [shape = 'u8[512]{0}', space=vmem, size = 0x400, scoped, tag = 'output window, operand 0, single buffered']
    %11 = vsyncpa [#allocation4], 0
    %12 = vsyncpa [#allocation7], 0
    %13 = vsyncpa [#allocation5], 0
    // Predicated region
    $region2: #{tpu_custom_call.1} parent=1 // pred_check
      _
    $region3: #{tpu_custom_call.1} parent=1 // pred_check_branch
      %15 = sbr.rel (0) target = $region5
    $region4: #{tpu_custom_call.1} parent=1 // pred_region
      %17 = vsyncadd [#allocation4], 0
      %s19 = sshll.u32 %s0, 4
      %s20 = int_to_ptr.hbm [resolvable:$true] %s19
      %s21 = sshll.u32 [#allocation3], 4
      %s22 = int_to_ptr.vmem [resolvable:$true] %s21
      %24 = dma.hbm_to_vmem [thread:$0]  %s20, 128, %s22, [#allocation4]
    $region5: #{tpu_custom_call.1} parent=1 // pred_fallthru
      _
    // Predicated region
    $region6: #{tpu_custom_call.1} parent=1 // pred_check
      _
    $region7: #{tpu_custom_call.1} parent=1 // pred_check_branch
      %26 = sbr.rel (0) target = $region9
    $region8: #{tpu_custom_call.1} parent=1 // pred_region
      %28 = vsyncadd [#allocation7], 0
      %s29 = sshll.u32 %s1, 4
      %s30 = int_to_ptr.hbm [resolvable:$true] %s29
      %s31 = sshll.u32 [#allocation6], 4
      %s32 = int_to_ptr.vmem [resolvable:$true] %s31
      %37 = dma.hbm_to_vmem [thread:$0]  %s30, 256, %s32, [#allocation7], 128, 128, 8
    $region9: #{tpu_custom_call.1} parent=1 // pred_fallthru
      _
    // Predicated region
    $region10: #{tpu_custom_call.1} parent=1 // pred_check
      _
    $region11: #{tpu_custom_call.1} parent=1 // pred_check_branch
      %39 = sbr.rel (0) target = $region13
    $region12: #{tpu_custom_call.1} parent=1 // pred_region
      _
    $region13: #{tpu_custom_call.1} parent=1 // pred_fallthru
      _
    // Predicated region
    $region14: #{tpu_custom_call.1} parent=1 // pred_check
      _
    $region15: #{tpu_custom_call.1} parent=1 // pred_check_branch
      %41 = sbr.rel (0) target = $region17
    $region16: #{tpu_custom_call.1} parent=1 // pred_region
      _
    $region17: #{tpu_custom_call.1} parent=1 // pred_fallthru
      _
    // Predicated region
    $region18: #{tpu_custom_call.1} parent=1 // pred_check
      _
    $region19: #{tpu_custom_call.1} parent=1 // pred_check_branch
      %43 = sbr.rel (0) target = $region21
    $region20: #{tpu_custom_call.1} parent=1 // pred_region
      _
    $region21: #{tpu_custom_call.1} parent=1 // pred_fallthru
      _
    // Predicated region
    $region22: #{tpu_custom_call.1} parent=1 // pred_check
      _
    $region23: #{tpu_custom_call.1} parent=1 // pred_check_branch
      %45 = sbr.rel (0) target = $region25
    $region24: #{tpu_custom_call.1} parent=1 // pred_region
      %47 = dma.done [#allocation4], 128
    $region25: #{tpu_custom_call.1} parent=1 // pred_fallthru
      _
    // Predicated region
    $region26: #{tpu_custom_call.1} parent=1 // pred_check
      _
    $region27: #{tpu_custom_call.1} parent=1 // pred_check_branch
      %49 = sbr.rel (0) target = $region29
    $region28: #{tpu_custom_call.1} parent=1 // pred_region
      %51 = dma.done [#allocation7], 256
    $region29: #{tpu_custom_call.1} parent=1 // pred_fallthru
      _
    %v52 = vld [vmem:[#allocation3] sm:$0xff]
    %v53 = vld [vmem:[#allocation6] sm:$0xff]
    %v54 = vld [vmem:[#allocation6 + $0x8] sm:$0xff]
    %v55 = vld [vmem:[%s2] sm:$0x1]
    %v57 = vperm.slane %v55, 0
    %vm59 = vcmask 130048
    %v61 = vsel %vm59, %v52, 0
    %63 = vmatpush.msra.mxu0 0.0
    %64 = vmatpush.msra.mxu0 0.0
    %65 = vmatpush.msra.mxu0 0.0
    %66 = vmatpush.msra.mxu0 0.0
    %67 = vmatpush.msra.mxu0 0.0
    %68 = vmatpush.msra.mxu0 0.0
    %69 = vmatpush.msra.mxu0 0.0
    %70 = vmatpush.msra.mxu0 0.0
    %71 = vmatpush.msra.mxu0 0.0
    %72 = vmatpush.msra.mxu0 0.0
    %73 = vmatpush.msra.mxu0 0.0
    %74 = vmatpush.msra.mxu0 0.0
    %75 = vmatpush.msra.mxu0 0.0
    %76 = vmatpush.msra.mxu0 0.0
    %77 = vmatpush.msra.mxu0 %v54
    %78 = vmatpush.msra.mxu0 %v53
    %79 = vmatmul.f32.gmra.mxu0 %v61
    %v80 = vpop.f32.mrf.mxu0
    %v81 = vadd.f32 %v57, %v80
    %82 = vdwg.mxu0
    %v83 = vmax.f32 %v81, 0.0
    %v84 = vld [vmem:[%s3] sm:$0x1]
    %s85 = sld [smem:[#allocation2]]
    %v86 = vstv %s85
    %vm87 = vcmask 261120
    %v89 = vsel %vm87, %v84, 0
    %v92 = vsel %vm87, %v83, 0
    %94 = vmatpush.xpose.msra.mxu0 0.0
    %95 = vmatpush.xpose.msra.mxu0 0.0
    %96 = vmatpush.xpose.msra.mxu0 0.0
    %97 = vmatpush.xpose.msra.mxu0 0.0
    %98 = vmatpush.xpose.msra.mxu0 0.0
    %99 = vmatpush.xpose.msra.mxu0 0.0
    %100 = vmatpush.xpose.msra.mxu0 0.0
    %101 = vmatpush.xpose.msra.mxu0 0.0
    %102 = vmatpush.xpose.msra.mxu0 0.0
    %103 = vmatpush.xpose.msra.mxu0 0.0
    %104 = vmatpush.xpose.msra.mxu0 0.0
    %105 = vmatpush.xpose.msra.mxu0 0.0
    %106 = vmatpush.xpose.msra.mxu0 0.0
    %107 = vmatpush.xpose.msra.mxu0 0.0
    %108 = vmatpush.xpose.msra.mxu0 0.0
    %109 = vmatpush.xpose.msra.mxu0 %v92
    %110 = vmatmul.f32.gmra.mxu0 %v89
    %v111 = vpop.f32.mrf.mxu0
    %v112 = vadd.f32 %v86, %v111
    %113 = vdwg.mxu0
    %vm114 = vcmask 57344
    %115 = vst.msk [vmem:[#allocation8] sm:$0x1] %vm114, %v112
    // Predicated region
    $region30: #{tpu_custom_call.1} parent=1 // pred_check
      _
    $region31: #{tpu_custom_call.1} parent=1 // pred_check_branch
      %117 = sbr.rel (0) target = $region33
    $region32: #{tpu_custom_call.1} parent=1 // pred_region
      %119 = vsyncadd [#allocation5], 0
      %s121 = sshll.u32 [#allocation8], 4
      %s122 = int_to_ptr.vmem [resolvable:$true] %s121
      %s123 = sshll.u32 %s5, 4
      %s124 = int_to_ptr.hbm [resolvable:$true] %s123
      %126 = dma.vmem_to_hbm [thread:$0]  %s122, 16, %s124, [#allocation5]
    $region33: #{tpu_custom_call.1} parent=1 // pred_fallthru
      _
    // Predicated region
    $region34: #{tpu_custom_call.1} parent=1 // pred_check
      _
    $region35: #{tpu_custom_call.1} parent=1 // pred_check_branch
      %128 = sbr.rel (0) target = $region37
    $region36: #{tpu_custom_call.1} parent=1 // pred_region
      %130 = dma.done [#allocation5], 16
    $region37: #{tpu_custom_call.1} parent=1 // pred_fallthru
      _
    %131 = vsyncpa [#allocation4], 1
    %132 = vsyncpa [#allocation7], 1
    %133 = vsyncpa [#allocation5], 1

</llo_original>
